<compile_context>
chip_gen: v6e
topology: v6e:2x2x1
jax: 0.10.0
libtpu: 0.0.40
codegen_flags: <defaults>
</compile_context>

<pallas_src>
import jax
import jax.numpy as jnp
from jax.experimental import pallas as pl
from jax.experimental.pallas import tpu as pltpu  # noqa: F401  (no TPU-specific features needed at this size)

# ---------------- model hyper-params (small, consistent with the module) ----------------
B = 2          # batch
S = 8          # sequence length (tokens)
D = 32         # hidden_d
N_HEADS = 2
D_HEAD = D // N_HEADS
MLP_RATIO = 4
D_MLP = MLP_RATIO * D          # 128 -> full lane width for the MLP hidden activation
LN_EPS = 1e-5

_INV_SQRT2 = 0.7071067811865476
_PREC = jax.lax.Precision.HIGHEST   # for the pure-JAX reference only


def _erf_poly(z):
    # Abramowitz & Stegun 7.1.26, |error| <= 1.5e-7.  Uses only exp/div/where/mul-add,
    # all of which have Mosaic lowerings (lax.erf itself is not guaranteed to lower).
    a1, a2, a3, a4, a5 = 0.254829592, -0.284496736, 1.421413741, -1.453152027, 1.061405429
    p = 0.3275911
    az = jnp.abs(z)
    t = 1.0 / (1.0 + p * az)
    poly = ((((a5 * t + a4) * t + a3) * t + a2) * t + a1) * t
    e = 1.0 - poly * jnp.exp(-az * az)
    return jnp.where(z >= 0.0, e, -e)


# ---------------- Pallas kernel (single invocation, all tokens at once) ----------------
def vit_block_kernel(x_ref,
                     ln1g_ref, ln1b_ref,
                     wqkv_ref, bqkv_ref,
                     ln2g_ref, ln2b_ref,
                     w1_ref, b1_ref, w2_ref, b2_ref,
                     o_ref):
    # x_ref is the flattened (B*S, D) token slab.
    x = x_ref[...].astype(jnp.float32)

    def layernorm(v, g, b):
        mu = jnp.mean(v, axis=-1, keepdims=True)
        var = jnp.mean((v - mu) * (v - mu), axis=-1, keepdims=True)  # biased, like nn.LayerNorm
        return (v - mu) * jax.lax.rsqrt(var + LN_EPS) * g + b

    # ---- norm1 + multi-head self-attention ----
    xn = layernorm(x, ln1g_ref[...], ln1b_ref[...])

    # Fused Q|K|V projection: one (B*S, D) x (D, 3D) MXU matmul.  The per-head weights sit
    # on the block diagonal and 1/sqrt(d_head) is already folded into the Q block + bias.
    qkv = jnp.dot(xn, wqkv_ref[...], preferred_element_type=jnp.float32) + bqkv_ref[...]

    head_outs = []
    for h in range(N_HEADS):   # static 2-iteration loop; each iteration is batched over B
        cq = slice(h * D_HEAD, (h + 1) * D_HEAD)
        ck = slice(D + h * D_HEAD, D + (h + 1) * D_HEAD)
        cv = slice(2 * D + h * D_HEAD, 2 * D + (h + 1) * D_HEAD)
        q = qkv[:, cq].reshape(B, S, D_HEAD)          # (B, S, d_head), scale pre-folded
        k = qkv[:, ck].reshape(B, S, D_HEAD)
        v = qkv[:, cv].reshape(B, S, D_HEAD)

        # scores without materializing k.T (contract last dims), batched over B
        s = jnp.einsum('bqd,bkd->bqk', q, k, preferred_element_type=jnp.float32)  # (B, S, S)
        s = s - jnp.max(s, axis=-1, keepdims=True)
        p = jnp.exp(s)
        p = p / jnp.sum(p, axis=-1, keepdims=True)    # exact softmax(dim=-1)
        o_h = jnp.einsum('bqk,bkd->bqd', p, v, preferred_element_type=jnp.float32)
        head_outs.append(o_h.reshape(B * S, D_HEAD))

    # combine heads in vregs (lane concat) -> no VMEM scratch store->load round trip
    attn = jnp.concatenate(head_outs, axis=-1)        # (B*S, D)
    out1 = x + attn                                   # residual 1

    # ---- norm2 + MLP (Linear -> exact GELU -> Linear) ----
    yn = layernorm(out1, ln2g_ref[...], ln2b_ref[...])
    h1 = jnp.dot(yn, w1_ref[...], preferred_element_type=jnp.float32) + b1_ref[...]
    g = 0.5 * h1 * (1.0 + _erf_poly(h1 * _INV_SQRT2))     # nn.GELU (approximate='none')
    h2 = jnp.dot(g, w2_ref[...], preferred_element_type=jnp.float32) + b2_ref[...]

    o_ref[...] = (out1 + h2).astype(o_ref.dtype)          # residual 2


# ---------------- weight packing: block-diagonal fused QKV with scale folded in ----------------
# Runs ONCE at parameter-build time (hoisted out of the per-call path).
def pack_qkv(wq, bq, wk, bk, wv, bv):
    scale = 1.0 / (D_HEAD ** 0.5)
    wqkv = jnp.zeros((D, 3 * D), jnp.float32)
    bqkv = jnp.zeros((1, 3 * D), jnp.float32)
    for h in range(N_HEADS):
        r = slice(h * D_HEAD, (h + 1) * D_HEAD)
        wqkv = wqkv.at[r, h * D_HEAD:(h + 1) * D_HEAD].set(wq[h] * scale)
        wqkv = wqkv.at[r, D + h * D_HEAD:D + (h + 1) * D_HEAD].set(wk[h])
        wqkv = wqkv.at[r, 2 * D + h * D_HEAD:2 * D + (h + 1) * D_HEAD].set(wv[h])
        bqkv = bqkv.at[0, h * D_HEAD:(h + 1) * D_HEAD].set(bq[h, 0] * scale)
        bqkv = bqkv.at[0, D + h * D_HEAD:D + (h + 1) * D_HEAD].set(bk[h, 0])
        bqkv = bqkv.at[0, 2 * D + h * D_HEAD:2 * D + (h + 1) * D_HEAD].set(bv[h, 0])
    return wqkv, bqkv


# ---------------- wrapper (jitted; packing already hoisted out) ----------------
@jax.jit
def vit_block(x, fused_params):
    (ln1g, ln1b, wqkv, bqkv, ln2g, ln2b, w1, b1, w2, b2) = fused_params
    x2 = x.reshape(B * S, D)                            # flat token slab

    # No grid / no BlockSpecs: single invocation, every operand is a full-array VMEM block.
    out2 = pl.pallas_call(
        vit_block_kernel,
        out_shape=jax.ShapeDtypeStruct((B * S, D), x.dtype),
    )(x2, ln1g, ln1b, wqkv, bqkv, ln2g, ln2b, w1, b1, w2, b2)

    return out2.reshape(B, S, D)


# ---------------- pure-JAX reference (mirrors the PyTorch module, unfused params) ----------------
def ref_block(x, params):
    (ln1g, ln1b, wq, bq, wk, bk, wv, bv, ln2g, ln2b, w1, b1, w2, b2) = params

    def layernorm(v, g, b):
        mu = jnp.mean(v, axis=-1, keepdims=True)
        var = jnp.mean((v - mu) ** 2, axis=-1, keepdims=True)
        return (v - mu) / jnp.sqrt(var + LN_EPS) * g + b

    xn = layernorm(x, ln1g, ln1b)
    heads = []
    for h in range(N_HEADS):
        xh = xn[:, :, h * D_HEAD:(h + 1) * D_HEAD]
        q = jnp.einsum("bsd,de->bse", xh, wq[h], precision=_PREC) + bq[h]
        k = jnp.einsum("bsd,de->bse", xh, wk[h], precision=_PREC) + bk[h]
        v = jnp.einsum("bsd,de->bse", xh, wv[h], precision=_PREC) + bv[h]
        s = jnp.einsum("bqd,bkd->bqk", q, k, precision=_PREC) / (D_HEAD ** 0.5)
        p = jax.nn.softmax(s, axis=-1)
        heads.append(jnp.einsum("bqk,bkd->bqd", p, v, precision=_PREC))
    out1 = x + jnp.concatenate(heads, axis=-1)
    yn = layernorm(out1, ln2g, ln2b)
    h1 = jnp.einsum("bsd,dm->bsm", yn, w1, precision=_PREC) + b1
    g = 0.5 * h1 * (1.0 + jax.lax.erf(h1 * _INV_SQRT2))
    return out1 + (jnp.einsum("bsm,md->bsd", g, w2, precision=_PREC) + b2)


# ---------------- deterministic parameter init ----------------
def make_params(key):
    ks = jax.random.split(key, 16)
    f = jnp.float32
    ln1g = jnp.ones((1, D), f)
    ln1b = jnp.zeros((1, D), f)
    ln2g = jnp.ones((1, D), f)
    ln2b = jnp.zeros((1, D), f)
    # per-head q/k/v linears (stored as (in, out); y = x @ W + b)
    wq = 0.1 * jax.random.normal(ks[0], (N_HEADS, D_HEAD, D_HEAD), f)
    bq = 0.1 * jax.random.normal(ks[1], (N_HEADS, 1, D_HEAD), f)
    wk = 0.1 * jax.random.normal(ks[2], (N_HEADS, D_HEAD, D_HEAD), f)
    bk = 0.1 * jax.random.normal(ks[3], (N_HEADS, 1, D_HEAD), f)
    wv = 0.1 * jax.random.normal(ks[4], (N_HEADS, D_HEAD, D_HEAD), f)
    bv = 0.1 * jax.random.normal(ks[5], (N_HEADS, 1, D_HEAD), f)
    w1 = 0.1 * jax.random.normal(ks[6], (D, D_MLP), f)
    b1 = 0.1 * jax.random.normal(ks[7], (1, D_MLP), f)
    w2 = 0.1 * jax.random.normal(ks[8], (D_MLP, D), f)
    b2 = 0.1 * jax.random.normal(ks[9], (1, D), f)
    return (ln1g, ln1b, wq, bq, wk, bk, wv, bv, ln2g, ln2b, w1, b1, w2, b2)


if __name__ == "__main__":
    key = jax.random.PRNGKey(0)
    kx, kp = jax.random.split(key)
    x = jax.random.normal(kx, (B, S, D), jnp.float32)
    params = make_params(kp)
    (ln1g, ln1b, wq, bq, wk, bk, wv, bv, ln2g, ln2b, w1, b1, w2, b2) = params

    # one-time packing, outside the per-call path
    wqkv, bqkv = pack_qkv(wq, bq, wk, bk, wv, bv)
    fused_params = (ln1g, ln1b, wqkv, bqkv, ln2g, ln2b, w1, b1, w2, b2)

    out = vit_block(x, fused_params)
    out = jax.block_until_ready(out)

    ref = ref_block(x, params)
    assert out.shape == (B, S, D)
    assert jnp.max(jnp.abs(out - ref)) < 1e-4, "mismatch vs. pure-JAX reference"

    print("KERNEL_OK")
</pallas_src>

<mosaic_0001>
module attributes {stable_mosaic.version = 11 : i64} {
  func.func @vit_block_kernel(%arg0: memref<16x32xf32, #tpu.memory_space<vmem>>, %arg1: memref<1x32xf32, #tpu.memory_space<vmem>>, %arg2: memref<1x32xf32, #tpu.memory_space<vmem>>, %arg3: memref<32x96xf32, #tpu.memory_space<vmem>>, %arg4: memref<1x96xf32, #tpu.memory_space<vmem>>, %arg5: memref<1x32xf32, #tpu.memory_space<vmem>>, %arg6: memref<1x32xf32, #tpu.memory_space<vmem>>, %arg7: memref<32x128xf32, #tpu.memory_space<vmem>>, %arg8: memref<1x128xf32, #tpu.memory_space<vmem>>, %arg9: memref<128x32xf32, #tpu.memory_space<vmem>>, %arg10: memref<1x32xf32, #tpu.memory_space<vmem>>, %arg11: memref<16x32xf32, #tpu.memory_space<vmem>>) attributes {dimension_semantics = [], scalar_prefetch = 0 : i64, scratch_operands = 0 : i64, tpu.core_type = #tpu.core_type<tc>} {
    %c0 = arith.constant 0 : index
    %c0_0 = arith.constant 0 : index
    %0 = vector.load %arg0[%c0, %c0_0] : memref<16x32xf32, #tpu.memory_space<vmem>>, vector<16x32xf32>
    %c0_1 = arith.constant 0 : index
    %c0_2 = arith.constant 0 : index
    %1 = vector.load %arg1[%c0_1, %c0_2] : memref<1x32xf32, #tpu.memory_space<vmem>>, vector<1x32xf32>
    %c0_3 = arith.constant 0 : index
    %c0_4 = arith.constant 0 : index
    %2 = vector.load %arg2[%c0_3, %c0_4] : memref<1x32xf32, #tpu.memory_space<vmem>>, vector<1x32xf32>
    %cst = arith.constant dense<0.000000e+00> : vector<16xf32>
    %3 = vector.multi_reduction <add>, %0, %cst [1] : vector<16x32xf32> to vector<16xf32>
    %4 = vector.shape_cast %3 : vector<16xf32> to vector<16x1xf32>
    %cst_5 = arith.constant 3.200000e+01 : f32
    %5 = vector.broadcast %cst_5 : f32 to vector<16x1xf32>
    %6 = arith.divf %4, %5 : vector<16x1xf32>
    %7 = vector.broadcast %6 : vector<16x1xf32> to vector<16x32xf32>
    %8 = arith.subf %0, %7 : vector<16x32xf32>
    %9 = vector.broadcast %6 : vector<16x1xf32> to vector<16x32xf32>
    %10 = arith.subf %0, %9 : vector<16x32xf32>
    %11 = arith.mulf %8, %10 : vector<16x32xf32>
    %cst_6 = arith.constant dense<0.000000e+00> : vector<16xf32>
    %12 = vector.multi_reduction <add>, %11, %cst_6 [1] : vector<16x32xf32> to vector<16xf32>
    %13 = vector.shape_cast %12 : vector<16xf32> to vector<16x1xf32>
    %cst_7 = arith.constant 3.200000e+01 : f32
    %14 = vector.broadcast %cst_7 : f32 to vector<16x1xf32>
    %15 = arith.divf %13, %14 : vector<16x1xf32>
    %16 = vector.broadcast %6 : vector<16x1xf32> to vector<16x32xf32>
    %17 = arith.subf %0, %16 : vector<16x32xf32>
    %cst_8 = arith.constant 9.99999974E-6 : f32
    %18 = vector.broadcast %cst_8 : f32 to vector<16x1xf32>
    %19 = arith.addf %15, %18 : vector<16x1xf32>
    %20 = math.rsqrt %19 : vector<16x1xf32>
    %21 = vector.broadcast %20 : vector<16x1xf32> to vector<16x32xf32>
    %22 = arith.mulf %17, %21 : vector<16x32xf32>
    %23 = vector.broadcast %1 : vector<1x32xf32> to vector<16x32xf32>
    %24 = arith.mulf %22, %23 : vector<16x32xf32>
    %25 = vector.broadcast %2 : vector<1x32xf32> to vector<16x32xf32>
    %26 = arith.addf %24, %25 : vector<16x32xf32>
    %c0_9 = arith.constant 0 : index
    %c0_10 = arith.constant 0 : index
    %27 = vector.load %arg3[%c0_9, %c0_10] : memref<32x96xf32, #tpu.memory_space<vmem>>, vector<32x96xf32>
    %cst_11 = arith.constant dense<0.000000e+00> : vector<16x96xf32>
    %28 = tpu.matmul %26, %27, %cst_11 {dimension_numbers = #tpu.dot_dimension_numbers<[1], [0], [0], [1], [0, 0, 1, 1], [], []>} : vector<16x32xf32>, vector<32x96xf32>, vector<16x96xf32> -> vector<16x96xf32>
    %c0_12 = arith.constant 0 : index
    %c0_13 = arith.constant 0 : index
    %29 = vector.load %arg4[%c0_12, %c0_13] : memref<1x96xf32, #tpu.memory_space<vmem>>, vector<1x96xf32>
    %30 = vector.broadcast %29 : vector<1x96xf32> to vector<16x96xf32>
    %31 = arith.addf %28, %30 : vector<16x96xf32>
    %32 = vector.extract_strided_slice %31 {offsets = [0, 0], sizes = [16, 16], strides = [1, 1]} : vector<16x96xf32> to vector<16x16xf32>
    %33 = vector.shape_cast %32 : vector<16x16xf32> to vector<2x8x16xf32>
    %34 = vector.extract_strided_slice %31 {offsets = [0, 32], sizes = [16, 16], strides = [1, 1]} : vector<16x96xf32> to vector<16x16xf32>
    %35 = vector.shape_cast %34 : vector<16x16xf32> to vector<2x8x16xf32>
    %36 = vector.extract_strided_slice %31 {offsets = [0, 64], sizes = [16, 16], strides = [1, 1]} : vector<16x96xf32> to vector<16x16xf32>
    %37 = vector.shape_cast %36 : vector<16x16xf32> to vector<2x8x16xf32>
    "tpu.trace_start"() <{level = 10 : i32, message = "bqd,bkd->bqk"}> : () -> ()
    %cst_14 = arith.constant dense<0.000000e+00> : vector<2x8x8xf32>
    %38 = tpu.matmul %33, %35, %cst_14 {dimension_numbers = #tpu.dot_dimension_numbers<[2], [2], [1], [1], [0, 0, 0, 1, 1, 1], [0], [0]>} : vector<2x8x16xf32>, vector<2x8x16xf32>, vector<2x8x8xf32> -> vector<2x8x8xf32>
    "tpu.trace_stop"() : () -> ()
    %cst_15 = arith.constant dense<0xFF800000> : vector<2x8xf32>
    %39 = vector.multi_reduction <maximumf>, %38, %cst_15 [2] : vector<2x8x8xf32> to vector<2x8xf32>
    %40 = vector.shape_cast %39 : vector<2x8xf32> to vector<2x8x1xf32>
    %41 = vector.broadcast %40 : vector<2x8x1xf32> to vector<2x8x8xf32>
    %42 = arith.subf %38, %41 : vector<2x8x8xf32>
    %43 = math.exp %42 : vector<2x8x8xf32>
    %cst_16 = arith.constant dense<0.000000e+00> : vector<2x8xf32>
    %44 = vector.multi_reduction <add>, %43, %cst_16 [2] : vector<2x8x8xf32> to vector<2x8xf32>
    %45 = vector.shape_cast %44 : vector<2x8xf32> to vector<2x8x1xf32>
    %46 = vector.broadcast %45 : vector<2x8x1xf32> to vector<2x8x8xf32>
    %47 = arith.divf %43, %46 : vector<2x8x8xf32>
    "tpu.trace_start"() <{level = 10 : i32, message = "bqk,bkd->bqd"}> : () -> ()
    %cst_17 = arith.constant dense<0.000000e+00> : vector<2x8x16xf32>
    %48 = tpu.matmul %47, %37, %cst_17 {dimension_numbers = #tpu.dot_dimension_numbers<[2], [1], [1], [2], [0, 0, 0, 1, 1, 2], [0], [0]>} : vector<2x8x8xf32>, vector<2x8x16xf32>, vector<2x8x16xf32> -> vector<2x8x16xf32>
    "tpu.trace_stop"() : () -> ()
    %49 = vector.shape_cast %48 : vector<2x8x16xf32> to vector<16x16xf32>
    %50 = vector.extract_strided_slice %31 {offsets = [0, 16], sizes = [16, 16], strides = [1, 1]} : vector<16x96xf32> to vector<16x16xf32>
    %51 = vector.shape_cast %50 : vector<16x16xf32> to vector<2x8x16xf32>
    %52 = vector.extract_strided_slice %31 {offsets = [0, 48], sizes = [16, 16], strides = [1, 1]} : vector<16x96xf32> to vector<16x16xf32>
    %53 = vector.shape_cast %52 : vector<16x16xf32> to vector<2x8x16xf32>
    %54 = vector.extract_strided_slice %31 {offsets = [0, 80], sizes = [16, 16], strides = [1, 1]} : vector<16x96xf32> to vector<16x16xf32>
    %55 = vector.shape_cast %54 : vector<16x16xf32> to vector<2x8x16xf32>
    "tpu.trace_start"() <{level = 10 : i32, message = "bqd,bkd->bqk"}> : () -> ()
    %cst_18 = arith.constant dense<0.000000e+00> : vector<2x8x8xf32>
    %56 = tpu.matmul %51, %53, %cst_18 {dimension_numbers = #tpu.dot_dimension_numbers<[2], [2], [1], [1], [0, 0, 0, 1, 1, 1], [0], [0]>} : vector<2x8x16xf32>, vector<2x8x16xf32>, vector<2x8x8xf32> -> vector<2x8x8xf32>
    "tpu.trace_stop"() : () -> ()
    %cst_19 = arith.constant dense<0xFF800000> : vector<2x8xf32>
    %57 = vector.multi_reduction <maximumf>, %56, %cst_19 [2] : vector<2x8x8xf32> to vector<2x8xf32>
    %58 = vector.shape_cast %57 : vector<2x8xf32> to vector<2x8x1xf32>
    %59 = vector.broadcast %58 : vector<2x8x1xf32> to vector<2x8x8xf32>
    %60 = arith.subf %56, %59 : vector<2x8x8xf32>
    %61 = math.exp %60 : vector<2x8x8xf32>
    %cst_20 = arith.constant dense<0.000000e+00> : vector<2x8xf32>
    %62 = vector.multi_reduction <add>, %61, %cst_20 [2] : vector<2x8x8xf32> to vector<2x8xf32>
    %63 = vector.shape_cast %62 : vector<2x8xf32> to vector<2x8x1xf32>
    %64 = vector.broadcast %63 : vector<2x8x1xf32> to vector<2x8x8xf32>
    %65 = arith.divf %61, %64 : vector<2x8x8xf32>
    "tpu.trace_start"() <{level = 10 : i32, message = "bqk,bkd->bqd"}> : () -> ()
    %cst_21 = arith.constant dense<0.000000e+00> : vector<2x8x16xf32>
    %66 = tpu.matmul %65, %55, %cst_21 {dimension_numbers = #tpu.dot_dimension_numbers<[2], [1], [1], [2], [0, 0, 0, 1, 1, 2], [0], [0]>} : vector<2x8x8xf32>, vector<2x8x16xf32>, vector<2x8x16xf32> -> vector<2x8x16xf32>
    "tpu.trace_stop"() : () -> ()
    %67 = vector.shape_cast %66 : vector<2x8x16xf32> to vector<16x16xf32>
    %68 = tpu.concatenate %49, %67 in 1 : vector<16x16xf32>, vector<16x16xf32> -> vector<16x32xf32>
    %69 = arith.addf %0, %68 : vector<16x32xf32>
    %c0_22 = arith.constant 0 : index
    %c0_23 = arith.constant 0 : index
    %70 = vector.load %arg5[%c0_22, %c0_23] : memref<1x32xf32, #tpu.memory_space<vmem>>, vector<1x32xf32>
    %c0_24 = arith.constant 0 : index
    %c0_25 = arith.constant 0 : index
    %71 = vector.load %arg6[%c0_24, %c0_25] : memref<1x32xf32, #tpu.memory_space<vmem>>, vector<1x32xf32>
    %cst_26 = arith.constant dense<0.000000e+00> : vector<16xf32>
    %72 = vector.multi_reduction <add>, %69, %cst_26 [1] : vector<16x32xf32> to vector<16xf32>
    %73 = vector.shape_cast %72 : vector<16xf32> to vector<16x1xf32>
    %cst_27 = arith.constant 3.200000e+01 : f32
    %74 = vector.broadcast %cst_27 : f32 to vector<16x1xf32>
    %75 = arith.divf %73, %74 : vector<16x1xf32>
    %76 = vector.broadcast %75 : vector<16x1xf32> to vector<16x32xf32>
    %77 = arith.subf %69, %76 : vector<16x32xf32>
    %78 = vector.broadcast %75 : vector<16x1xf32> to vector<16x32xf32>
    %79 = arith.subf %69, %78 : vector<16x32xf32>
    %80 = arith.mulf %77, %79 : vector<16x32xf32>
    %cst_28 = arith.constant dense<0.000000e+00> : vector<16xf32>
    %81 = vector.multi_reduction <add>, %80, %cst_28 [1] : vector<16x32xf32> to vector<16xf32>
    %82 = vector.shape_cast %81 : vector<16xf32> to vector<16x1xf32>
    %cst_29 = arith.constant 3.200000e+01 : f32
    %83 = vector.broadcast %cst_29 : f32 to vector<16x1xf32>
    %84 = arith.divf %82, %83 : vector<16x1xf32>
    %85 = vector.broadcast %75 : vector<16x1xf32> to vector<16x32xf32>
    %86 = arith.subf %69, %85 : vector<16x32xf32>
    %cst_30 = arith.constant 9.99999974E-6 : f32
    %87 = vector.broadcast %cst_30 : f32 to vector<16x1xf32>
    %88 = arith.addf %84, %87 : vector<16x1xf32>
    %89 = math.rsqrt %88 : vector<16x1xf32>
    %90 = vector.broadcast %89 : vector<16x1xf32> to vector<16x32xf32>
    %91 = arith.mulf %86, %90 : vector<16x32xf32>
    %92 = vector.broadcast %70 : vector<1x32xf32> to vector<16x32xf32>
    %93 = arith.mulf %91, %92 : vector<16x32xf32>
    %94 = vector.broadcast %71 : vector<1x32xf32> to vector<16x32xf32>
    %95 = arith.addf %93, %94 : vector<16x32xf32>
    %c0_31 = arith.constant 0 : index
    %c0_32 = arith.constant 0 : index
    %96 = vector.load %arg7[%c0_31, %c0_32] : memref<32x128xf32, #tpu.memory_space<vmem>>, vector<32x128xf32>
    %cst_33 = arith.constant dense<0.000000e+00> : vector<16x128xf32>
    %97 = tpu.matmul %95, %96, %cst_33 {dimension_numbers = #tpu.dot_dimension_numbers<[1], [0], [0], [1], [0, 0, 1, 1], [], []>} : vector<16x32xf32>, vector<32x128xf32>, vector<16x128xf32> -> vector<16x128xf32>
    %c0_34 = arith.constant 0 : index
    %c0_35 = arith.constant 0 : index
    %98 = vector.load %arg8[%c0_34, %c0_35] : memref<1x128xf32, #tpu.memory_space<vmem>>, vector<1x128xf32>
    %99 = vector.broadcast %98 : vector<1x128xf32> to vector<16x128xf32>
    %100 = arith.addf %97, %99 : vector<16x128xf32>
    %cst_36 = arith.constant 5.000000e-01 : f32
    %101 = vector.broadcast %cst_36 : f32 to vector<16x128xf32>
    %102 = arith.mulf %101, %100 : vector<16x128xf32>
    %cst_37 = arith.constant 0.707106769 : f32
    %103 = vector.broadcast %cst_37 : f32 to vector<16x128xf32>
    %104 = arith.mulf %100, %103 : vector<16x128xf32>
    %105 = math.absf %104 : vector<16x128xf32>
    %cst_38 = arith.constant 0.327591091 : f32
    %106 = vector.broadcast %cst_38 : f32 to vector<16x128xf32>
    %107 = arith.mulf %106, %105 : vector<16x128xf32>
    %cst_39 = arith.constant 1.000000e+00 : f32
    %108 = vector.broadcast %cst_39 : f32 to vector<16x128xf32>
    %109 = arith.addf %108, %107 : vector<16x128xf32>
    %cst_40 = arith.constant 1.000000e+00 : f32
    %110 = vector.broadcast %cst_40 : f32 to vector<16x128xf32>
    %111 = arith.divf %110, %109 : vector<16x128xf32>
    %cst_41 = arith.constant 1.06140542 : f32
    %112 = vector.broadcast %cst_41 : f32 to vector<16x128xf32>
    %113 = arith.mulf %112, %111 : vector<16x128xf32>
    %cst_42 = arith.constant -1.45315206 : f32
    %114 = vector.broadcast %cst_42 : f32 to vector<16x128xf32>
    %115 = arith.addf %113, %114 : vector<16x128xf32>
    %116 = arith.mulf %115, %111 : vector<16x128xf32>
    %cst_43 = arith.constant 1.42141378 : f32
    %117 = vector.broadcast %cst_43 : f32 to vector<16x128xf32>
    %118 = arith.addf %116, %117 : vector<16x128xf32>
    %119 = arith.mulf %118, %111 : vector<16x128xf32>
    %cst_44 = arith.constant -0.284496725 : f32
    %120 = vector.broadcast %cst_44 : f32 to vector<16x128xf32>
    %121 = arith.addf %119, %120 : vector<16x128xf32>
    %122 = arith.mulf %121, %111 : vector<16x128xf32>
    %cst_45 = arith.constant 0.254829586 : f32
    %123 = vector.broadcast %cst_45 : f32 to vector<16x128xf32>
    %124 = arith.addf %122, %123 : vector<16x128xf32>
    %125 = arith.mulf %124, %111 : vector<16x128xf32>
    %cst_46 = arith.constant 0.000000e+00 : f32
    %126 = vector.broadcast %cst_46 : f32 to vector<16x128xf32>
    %127 = arith.subf %126, %105 : vector<16x128xf32>
    %128 = arith.mulf %127, %105 : vector<16x128xf32>
    %129 = math.exp %128 : vector<16x128xf32>
    %130 = arith.mulf %125, %129 : vector<16x128xf32>
    %cst_47 = arith.constant 1.000000e+00 : f32
    %131 = vector.broadcast %cst_47 : f32 to vector<16x128xf32>
    %132 = arith.subf %131, %130 : vector<16x128xf32>
    %cst_48 = arith.constant 0.000000e+00 : f32
    %133 = vector.broadcast %cst_48 : f32 to vector<16x128xf32>
    %134 = arith.cmpf oge, %104, %133 : vector<16x128xf32>
    %cst_49 = arith.constant 0.000000e+00 : f32
    %135 = vector.broadcast %cst_49 : f32 to vector<16x128xf32>
    %136 = arith.subf %135, %132 : vector<16x128xf32>
    %137 = arith.select %134, %132, %136 : vector<16x128xi1>, vector<16x128xf32>
    %cst_50 = arith.constant 1.000000e+00 : f32
    %138 = vector.broadcast %cst_50 : f32 to vector<16x128xf32>
    %139 = arith.addf %138, %137 : vector<16x128xf32>
    %140 = arith.mulf %102, %139 : vector<16x128xf32>
    %c0_51 = arith.constant 0 : index
    %c0_52 = arith.constant 0 : index
    %141 = vector.load %arg9[%c0_51, %c0_52] : memref<128x32xf32, #tpu.memory_space<vmem>>, vector<128x32xf32>
    %cst_53 = arith.constant dense<0.000000e+00> : vector<16x32xf32>
    %142 = tpu.matmul %140, %141, %cst_53 {dimension_numbers = #tpu.dot_dimension_numbers<[1], [0], [0], [1], [0, 0, 1, 1], [], []>} : vector<16x128xf32>, vector<128x32xf32>, vector<16x32xf32> -> vector<16x32xf32>
    %c0_54 = arith.constant 0 : index
    %c0_55 = arith.constant 0 : index
    %143 = vector.load %arg10[%c0_54, %c0_55] : memref<1x32xf32, #tpu.memory_space<vmem>>, vector<1x32xf32>
    %144 = vector.broadcast %143 : vector<1x32xf32> to vector<16x32xf32>
    %145 = arith.addf %142, %144 : vector<16x32xf32>
    %146 = arith.addf %69, %145 : vector<16x32xf32>
    %c0_56 = arith.constant 0 : index
    %c0_57 = arith.constant 0 : index
    %147 = vector.load %arg11[%c0_56, %c0_57] : memref<16x32xf32, #tpu.memory_space<vmem>>, vector<16x32xf32>
    tpu.vector_store %arg11[%c0_56, %c0_57], %146 {strides = array<i32>} : memref<16x32xf32, #tpu.memory_space<vmem>>, vector<16x32xf32>,
    return
  }
}

</mosaic_0001>

<llo_original>
// kernel: vit_block.1
$region0: #{vit_block.1}
  #allocation0 [shape = 'u32[]', space=smem, size = 0x4, offset = 0x4, fixed_abs, tag = 'smem constant byte address 0x4 - core index']
  #allocation1 [shape = 'u32[144,128]{1,0:T(1,128)}', space=vmem, size = 0x12000, scoped, tag = 'internal scratch']
  %s0 = inlined_call_operand.vmem [shape: f32[16,32], index: 0, kind: input, shape index: {}]
  %s1 = inlined_call_operand.vmem [shape: f32[1,32], index: 1, kind: input, shape index: {}]
  %s2 = inlined_call_operand.vmem [shape: f32[1,32], index: 2, kind: input, shape index: {}]
  %s3 = inlined_call_operand.vmem [shape: f32[32,96], index: 3, kind: input, shape index: {}]
  %s4 = inlined_call_operand.vmem [shape: f32[1,96], index: 4, kind: input, shape index: {}]
  %s5 = inlined_call_operand.vmem [shape: f32[1,32], index: 5, kind: input, shape index: {}]
  %s6 = inlined_call_operand.vmem [shape: f32[1,32], index: 6, kind: input, shape index: {}]
  %s7 = inlined_call_operand.vmem [shape: f32[32,128], index: 7, kind: input, shape index: {}]
  %s8 = inlined_call_operand.vmem [shape: f32[1,128], index: 8, kind: input, shape index: {}]
  %s9 = inlined_call_operand.vmem [shape: f32[128,32], index: 9, kind: input, shape index: {}]
  %s10 = inlined_call_operand.vmem [shape: f32[1,32], index: 10, kind: input, shape index: {}]
  %s11 = inlined_call_operand.hbm [shape: f32[16,32], index: 11, kind: output, shape index: {}]
  %s12 = sld [smem:[#allocation0]]
  $region54: #{vit_block.1} parent=0
    _
  %s14 = ssub.s32 1, %s12
  %s15 = scalar_select 0, %s14, %s12
  $region1: #{vit_block.1} parent=0
    #allocation2 [shape = 'u8[8192]{0}', space=vmem, size = 0x2000, scoped, tag = 'output window, operand 0, single buffered']
    #allocation3 [shape = 's32[1]{0}', space=sflag, size = 0x4, scoped, tag = 'scoped memory for vit_block.1']
    %16 = vsyncpa [#allocation3], 0
    // Predicated region
    $region2: #{vit_block.1} parent=1 // pred_check
      _
    $region3: #{vit_block.1} parent=1 // pred_check_branch
      %18 = sbr.rel (0) target = $region5
    $region4: #{vit_block.1} parent=1 // pred_region
      _
    $region5: #{vit_block.1} parent=1 // pred_fallthru
      _
    // Predicated region
    $region6: #{vit_block.1} parent=1 // pred_check
      _
    $region7: #{vit_block.1} parent=1 // pred_check_branch
      %20 = sbr.rel (0) target = $region9
    $region8: #{vit_block.1} parent=1 // pred_region
      _
    $region9: #{vit_block.1} parent=1 // pred_fallthru
      _
    // Predicated region
    $region10: #{vit_block.1} parent=1 // pred_check
      _
    $region11: #{vit_block.1} parent=1 // pred_check_branch
      %22 = sbr.rel (0) target = $region13
    $region12: #{vit_block.1} parent=1 // pred_region
      _
    $region13: #{vit_block.1} parent=1 // pred_fallthru
      _
    // Predicated region
    $region14: #{vit_block.1} parent=1 // pred_check
      _
    $region15: #{vit_block.1} parent=1 // pred_check_branch
      %24 = sbr.rel (0) target = $region17
    $region16: #{vit_block.1} parent=1 // pred_region
      _
    $region17: #{vit_block.1} parent=1 // pred_fallthru
      _
    // Predicated region
    $region18: #{vit_block.1} parent=1 // pred_check
      _
    $region19: #{vit_block.1} parent=1 // pred_check_branch
      %26 = sbr.rel (0) target = $region21
    $region20: #{vit_block.1} parent=1 // pred_region
      _
    $region21: #{vit_block.1} parent=1 // pred_fallthru
      _
    // Predicated region
    $region22: #{vit_block.1} parent=1 // pred_check
      _
    $region23: #{vit_block.1} parent=1 // pred_check_branch
      %28 = sbr.rel (0) target = $region25
    $region24: #{vit_block.1} parent=1 // pred_region
      _
    $region25: #{vit_block.1} parent=1 // pred_fallthru
      _
    // Predicated region
    $region26: #{vit_block.1} parent=1 // pred_check
      _
    $region27: #{vit_block.1} parent=1 // pred_check_branch
      %30 = sbr.rel (0) target = $region29
    $region28: #{vit_block.1} parent=1 // pred_region
      _
    $region29: #{vit_block.1} parent=1 // pred_fallthru
      _
    // Predicated region
    $region30: #{vit_block.1} parent=1 // pred_check
      _
    $region31: #{vit_block.1} parent=1 // pred_check_branch
      %32 = sbr.rel (0) target = $region33
    $region32: #{vit_block.1} parent=1 // pred_region
      _
    $region33: #{vit_block.1} parent=1 // pred_fallthru
      _
    // Predicated region
    $region34: #{vit_block.1} parent=1 // pred_check
      _
    $region35: #{vit_block.1} parent=1 // pred_check_branch
      %34 = sbr.rel (0) target = $region37
    $region36: #{vit_block.1} parent=1 // pred_region
      _
    $region37: #{vit_block.1} parent=1 // pred_fallthru
      _
    // Predicated region
    $region38: #{vit_block.1} parent=1 // pred_check
      _
    $region39: #{vit_block.1} parent=1 // pred_check_branch
      %36 = sbr.rel (0) target = $region41
    $region40: #{vit_block.1} parent=1 // pred_region
      _
    $region41: #{vit_block.1} parent=1 // pred_fallthru
      _
    // Predicated region
    $region42: #{vit_block.1} parent=1 // pred_check
      _
    $region43: #{vit_block.1} parent=1 // pred_check_branch
      %38 = sbr.rel (0) target = $region45
    $region44: #{vit_block.1} parent=1 // pred_region
      _
    $region45: #{vit_block.1} parent=1 // pred_fallthru
      _
    %v39 = vld [vmem:[%s0] sm:$0xff]
    %v40 = vld [vmem:[%s0 + $0x8] sm:$0xff]
    %v41 = vld [vmem:[%s1] sm:$0x1]
    %v42 = vld [vmem:[%s2] sm:$0x1]
    %vm43 = vcmask 261120
    %v44 = vsel %vm43, %v39, 0.0
    %45 = vadd.xlane.f32.xlu0 %v44
    %v46 = vpop.xlane.xlu0 %45
    %v47 = vsel %vm43, %v40, 0.0
    %48 = vadd.xlane.f32.xlu0 %v47
    %v49 = vpop.xlane.xlu0 %48
    %v50 = vrcp.pop 32.0
    %v51 = vmul.f32 %v46, %v50
    %v52 = vmul.f32 %v49, %v50
    %v53 = vsub.f32 %v39, %v51
    %v54 = vsub.f32 %v40, %v52
    %v55 = vmul.f32 %v53, %v53
    %v56 = vmul.f32 %v54, %v54
    %v57 = vsel %vm43, %v55, 0.0
    %58 = vadd.xlane.f32.xlu0 %v57
    %v59 = vpop.xlane.xlu0 %58
    %v60 = vsel %vm43, %v56, 0.0
    %61 = vadd.xlane.f32.xlu0 %v60
    %v62 = vpop.xlane.xlu0 %61
    %v63 = vmul.f32 %v59, %v50
    %v64 = vmul.f32 %v62, %v50
    %v65 = vadd.f32 %v63, 1e-05
    %v66 = vadd.f32 %v64, 1e-05
    %v67 = vrsqrt.pop %v65
    %v68 = vrsqrt.pop %v66
    %v69 = vmul.f32 %v53, %v67
    %v70 = vmul.f32 %v54, %v68
    %v72 = vlaneseq
    %v73 = vshrl.u32 %v72, 7
    %v74 = vsub.s32 0, %v73
    %v75 = vrot.slane %v41, %v74
    %v77 = vmul.f32 %v69, %v75
    %v78 = vmul.f32 %v70, %v75
    %v80 = vlaneseq
    %v81 = vshrl.u32 %v80, 7
    %v82 = vsub.s32 0, %v81
    %v83 = vrot.slane %v42, %v82
    %v85 = vadd.f32 %v77, %v83
    %v86 = vadd.f32 %v78, %v83
    %v87 = vld [vmem:[%s3] sm:$0xff]
    %v88 = vld [vmem:[%s3 + $0x8] sm:$0xff]
    %v89 = vld [vmem:[%s3 + $0x10] sm:$0xff]
    %v90 = vld [vmem:[%s3 + $0x18] sm:$0xff]
    %v91 = vld [vmem:[%s4] sm:$0x1]
    %v93 = vlaneseq
    %v94 = vshrl.u32 %v93, 7
    %v95 = vsub.s32 0, %v94
    %v96 = vrot.slane %v91, %v95
    %v99 = vsel %vm43, %v85, 0
    %v102 = vsel %vm43, %v86, 0
    %104 = vmatprep.subr.mxu0 0.0
    %105 = vmatpush1.msra.mxu0 0.0
    %106 = vmatprep.subr.mxu0 0.0
    %107 = vmatpush1.msra.mxu0 0.0
    %108 = vmatprep.subr.mxu0 0.0
    %109 = vmatpush1.msra.mxu0 0.0
    %110 = vmatprep.subr.mxu0 0.0
    %111 = vmatpush1.msra.mxu0 0.0
    %112 = vmatprep.subr.mxu0 0.0
    %113 = vmatpush1.msra.mxu0 0.0
    %114 = vmatprep.subr.mxu0 0.0
    %115 = vmatpush1.msra.mxu0 0.0
    %116 = vmatprep.subr.mxu0 0.0
    %117 = vmatpush1.msra.mxu0 0.0
    %118 = vmatprep.subr.mxu0 0.0
    %119 = vmatpush1.msra.mxu0 0.0
    %120 = vmatprep.subr.mxu0 0.0
    %121 = vmatpush1.msra.mxu0 0.0
    %122 = vmatprep.subr.mxu0 0.0
    %123 = vmatpush1.msra.mxu0 0.0
    %124 = vmatprep.subr.mxu0 0.0
    %125 = vmatpush1.msra.mxu0 0.0
    %126 = vmatprep.subr.mxu0 0.0
    %127 = vmatpush1.msra.mxu0 0.0
    %128 = vmatprep.subr.mxu0 0.0
    %129 = vmatpush1.msra.mxu0 %v90
    %130 = vmatprep.subr.mxu0 0.0
    %131 = vmatpush1.msra.mxu0 %v89
    %132 = vmatprep.subr.mxu0 0.0
    %133 = vmatpush1.msra.mxu0 %v88
    %134 = vmatprep.subr.mxu0 0.0
    %135 = vmatpush1.msra.mxu0 %v87
    %136 = vmatprep.subr.mxu0 0.0
    %137 = vmatpush2.msra.mxu0 0.0
    %138 = vmatprep.subr.mxu0 0.0
    %139 = vmatpush2.msra.mxu0 0.0
    %140 = vmatprep.subr.mxu0 0.0
    %141 = vmatpush2.msra.mxu0 0.0
    %142 = vmatprep.subr.mxu0 0.0
    %143 = vmatpush2.msra.mxu0 0.0
    %144 = vmatprep.subr.mxu0 0.0
    %145 = vmatpush2.msra.mxu0 0.0
    %146 = vmatprep.subr.mxu0 0.0
    %147 = vmatpush2.msra.mxu0 0.0
    %148 = vmatprep.subr.mxu0 0.0
    %149 = vmatpush2.msra.mxu0 0.0
    %150 = vmatprep.subr.mxu0 0.0
    %151 = vmatpush2.msra.mxu0 0.0
    %152 = vmatprep.subr.mxu0 0.0
    %153 = vmatpush2.msra.mxu0 0.0
    %154 = vmatprep.subr.mxu0 0.0
    %155 = vmatpush2.msra.mxu0 0.0
    %156 = vmatprep.subr.mxu0 0.0
    %157 = vmatpush2.msra.mxu0 0.0
    %158 = vmatprep.subr.mxu0 0.0
    %159 = vmatpush2.msra.mxu0 0.0
    %160 = vmatprep.subr.mxu0 0.0
    %161 = vmatpush2.msra.mxu0 0.0
    %162 = vmatprep.subr.mxu0 0.0
    %163 = vmatpush2.msra.mxu0 0.0
    %164 = vmatprep.subr.mxu0 0.0
    %165 = vmatpush2.msra.mxu0 0.0
    %166 = vmatprep.subr.mxu0 0.0
    %167 = vmatpush2.msra.mxu0 0.0
    %168 = vmatprep.mubr.f32.mxu0 0.0
    %169 = vmatmul.mubr.f32.gmra.mxu0 %v99
    %v170 = vpop.f32.mrf.mxu0
    %v171 = vadd.f32 %v96, %v170
    %v172 = vpop.f32.mrf.mxu0
    %173 = vmatprep.mubr.f32.mxu0 0.0
    %174 = vmatmul.mubr.f32.gmra.mxu0 %v102
    %v175 = vpop.f32.mrf.mxu0
    %v176 = vadd.f32 %v96, %v175
    %v177 = vpop.f32.mrf.mxu0
    %178 = vdwg.mxu0
    %180 = vrot.lane.b32.xlu0 %v171, 96
    %v181 = vpop.permute.xlu0 %180
    %vm182 = vcmask 130048
    %v183 = vsel %vm182, %v171, 0
    %v185 = vsel %vm182, %v181, 0
    %187 = vmatprep.subr.mxu0 0.0
    %188 = vmatpush1.xpose.msra.mxu0 0.0
    %189 = vmatprep.subr.mxu0 0.0
    %190 = vmatpush1.xpose.msra.mxu0 0.0
    %191 = vmatprep.subr.mxu0 0.0
    %192 = vmatpush1.xpose.msra.mxu0 0.0
    %193 = vmatprep.subr.mxu0 0.0
    %194 = vmatpush1.xpose.msra.mxu0 0.0
    %195 = vmatprep.subr.mxu0 0.0
    %196 = vmatpush1.xpose.msra.mxu0 0.0
    %197 = vmatprep.subr.mxu0 0.0
    %198 = vmatpush1.xpose.msra.mxu0 0.0
    %199 = vmatprep.subr.mxu0 0.0
    %200 = vmatpush1.xpose.msra.mxu0 0.0
    %201 = vmatprep.subr.mxu0 0.0
    %202 = vmatpush1.xpose.msra.mxu0 0.0
    %203 = vmatprep.subr.mxu0 0.0
    %204 = vmatpush1.xpose.msra.mxu0 0.0
    %205 = vmatprep.subr.mxu0 0.0
    %206 = vmatpush1.xpose.msra.mxu0 0.0
    %207 = vmatprep.subr.mxu0 0.0
    %208 = vmatpush1.xpose.msra.mxu0 0.0
    %209 = vmatprep.subr.mxu0 0.0
    %210 = vmatpush1.xpose.msra.mxu0 0.0
    %211 = vmatprep.subr.mxu0 0.0
    %212 = vmatpush1.xpose.msra.mxu0 0.0
    %213 = vmatprep.subr.mxu0 0.0
    %214 = vmatpush1.xpose.msra.mxu0 0.0
    %215 = vmatprep.subr.mxu0 0.0
    %216 = vmatpush1.xpose.msra.mxu0 0.0
    %217 = vmatprep.subr.mxu0 0.0
    %218 = vmatpush1.xpose.msra.mxu0 %v185
    %219 = vmatprep.subr.mxu0 0.0
    %220 = vmatpush2.xpose.msra.mxu0 0.0
    %221 = vmatprep.subr.mxu0 0.0
    %222 = vmatpush2.xpose.msra.mxu0 0.0
    %223 = vmatprep.subr.mxu0 0.0
    %224 = vmatpush2.xpose.msra.mxu0 0.0
    %225 = vmatprep.subr.mxu0 0.0
    %226 = vmatpush2.xpose.msra.mxu0 0.0
    %227 = vmatprep.subr.mxu0 0.0
    %228 = vmatpush2.xpose.msra.mxu0 0.0
    %229 = vmatprep.subr.mxu0 0.0
    %230 = vmatpush2.xpose.msra.mxu0 0.0
    %231 = vmatprep.subr.mxu0 0.0
    %232 = vmatpush2.xpose.msra.mxu0 0.0
    %233 = vmatprep.subr.mxu0 0.0
    %234 = vmatpush2.xpose.msra.mxu0 0.0
    %235 = vmatprep.subr.mxu0 0.0
    %236 = vmatpush2.xpose.msra.mxu0 0.0
    %237 = vmatprep.subr.mxu0 0.0
    %238 = vmatpush2.xpose.msra.mxu0 0.0
    %239 = vmatprep.subr.mxu0 0.0
    %240 = vmatpush2.xpose.msra.mxu0 0.0
    %241 = vmatprep.subr.mxu0 0.0
    %242 = vmatpush2.xpose.msra.mxu0 0.0
    %243 = vmatprep.subr.mxu0 0.0
    %244 = vmatpush2.xpose.msra.mxu0 0.0
    %245 = vmatprep.subr.mxu0 0.0
    %246 = vmatpush2.xpose.msra.mxu0 0.0
    %247 = vmatprep.subr.mxu0 0.0
    %248 = vmatpush2.xpose.msra.mxu0 0.0
    %249 = vmatprep.subr.mxu0 0.0
    %250 = vmatpush2.xpose.msra.mxu0 0.0
    %251 = vmatprep.mubr.f32.mxu0 0.0
    %252 = vmatmul.mubr.f32.gmra.mxu0 %v183
    %v253 = vpop.f32.mrf.mxu0
    %v254 = vadd.f32 0.0, %v253
    %v255 = vpop.f32.mrf.mxu0
    %256 = vdwg.mxu0
    %258 = vrot.lane.b32.xlu0 %v176, 96
    %v259 = vpop.permute.xlu0 %258
    %v260 = vsel %vm182, %v176, 0
    %v262 = vsel %vm182, %v259, 0
    %264 = vmatprep.subr.mxu0 0.0
    %265 = vmatpush1.xpose.msra.mxu0 0.0
    %266 = vmatprep.subr.mxu0 0.0
    %267 = vmatpush1.xpose.msra.mxu0 0.0
    %268 = vmatprep.subr.mxu0 0.0
    %269 = vmatpush1.xpose.msra.mxu0 0.0
    %270 = vmatprep.subr.mxu0 0.0
    %271 = vmatpush1.xpose.msra.mxu0 0.0
    %272 = vmatprep.subr.mxu0 0.0
    %273 = vmatpush1.xpose.msra.mxu0 0.0
    %274 = vmatprep.subr.mxu0 0.0
    %275 = vmatpush1.xpose.msra.mxu0 0.0
    %276 = vmatprep.subr.mxu0 0.0
    %277 = vmatpush1.xpose.msra.mxu0 0.0
    %278 = vmatprep.subr.mxu0 0.0
    %279 = vmatpush1.xpose.msra.mxu0 0.0
    %280 = vmatprep.subr.mxu0 0.0
    %281 = vmatpush1.xpose.msra.mxu0 0.0
    %282 = vmatprep.subr.mxu0 0.0
    %283 = vmatpush1.xpose.msra.mxu0 0.0
    %284 = vmatprep.subr.mxu0 0.0
    %285 = vmatpush1.xpose.msra.mxu0 0.0
    %286 = vmatprep.subr.mxu0 0.0
    %287 = vmatpush1.xpose.msra.mxu0 0.0
    %288 = vmatprep.subr.mxu0 0.0
    %289 = vmatpush1.xpose.msra.mxu0 0.0
    %290 = vmatprep.subr.mxu0 0.0
    %291 = vmatpush1.xpose.msra.mxu0 0.0
    %292 = vmatprep.subr.mxu0 0.0
    %293 = vmatpush1.xpose.msra.mxu0 0.0
    %294 = vmatprep.subr.mxu0 0.0
    %295 = vmatpush1.xpose.msra.mxu0 %v262
    %296 = vmatprep.subr.mxu0 0.0
    %297 = vmatpush2.xpose.msra.mxu0 0.0
    %298 = vmatprep.subr.mxu0 0.0
    %299 = vmatpush2.xpose.msra.mxu0 0.0
    %300 = vmatprep.subr.mxu0 0.0
    %301 = vmatpush2.xpose.msra.mxu0 0.0
    %302 = vmatprep.subr.mxu0 0.0
    %303 = vmatpush2.xpose.msra.mxu0 0.0
    %304 = vmatprep.subr.mxu0 0.0
    %305 = vmatpush2.xpose.msra.mxu0 0.0
    %306 = vmatprep.subr.mxu0 0.0
    %307 = vmatpush2.xpose.msra.mxu0 0.0
    %308 = vmatprep.subr.mxu0 0.0
    %309 = vmatpush2.xpose.msra.mxu0 0.0
    %310 = vmatprep.subr.mxu0 0.0
    %311 = vmatpush2.xpose.msra.mxu0 0.0
    %312 = vmatprep.subr.mxu0 0.0
    %313 = vmatpush2.xpose.msra.mxu0 0.0
    %314 = vmatprep.subr.mxu0 0.0
    %315 = vmatpush2.xpose.msra.mxu0 0.0
    %316 = vmatprep.subr.mxu0 0.0
    %317 = vmatpush2.xpose.msra.mxu0 0.0
    %318 = vmatprep.subr.mxu0 0.0
    %319 = vmatpush2.xpose.msra.mxu0 0.0
    %320 = vmatprep.subr.mxu0 0.0
    %321 = vmatpush2.xpose.msra.mxu0 0.0
    %322 = vmatprep.subr.mxu0 0.0
    %323 = vmatpush2.xpose.msra.mxu0 0.0
    %324 = vmatprep.subr.mxu0 0.0
    %325 = vmatpush2.xpose.msra.mxu0 0.0
    %326 = vmatprep.subr.mxu0 0.0
    %327 = vmatpush2.xpose.msra.mxu0 0.0
    %328 = vmatprep.mubr.f32.mxu0 0.0
    %329 = vmatmul.mubr.f32.gmra.mxu0 %v260
    %v330 = vpop.f32.mrf.mxu0
    %v331 = vadd.f32 0.0, %v330
    %v332 = vpop.f32.mrf.mxu0
    %333 = vdwg.mxu0
    %vm334 = vcmask 64512
    %v335 = vsel %vm334, %v254, -inf
    %336 = vmax.xlane.f32.xlu0 %v335
    %v337 = vpop.xlane.xlu0 %336
    %v338 = vsel %vm334, %v331, -inf
    %339 = vmax.xlane.f32.xlu0 %v338
    %v340 = vpop.xlane.xlu0 %339
    %v341 = vsub.f32 %v254, %v337
    %v342 = vsub.f32 %v331, %v340
    %v343 = vmul.f32 %v341, 1.442695
    %v344 = vpow.pop %v343
    %v345 = vmul.f32 %v342, 1.442695
    %v346 = vpow.pop %v345
    %v347 = vsel %vm334, %v344, 0.0
    %348 = vadd.xlane.f32.xlu0 %v347
    %v349 = vpop.xlane.xlu0 %348
    %v350 = vsel %vm334, %v346, 0.0
    %351 = vadd.xlane.f32.xlu0 %v350
    %v352 = vpop.xlane.xlu0 %351
    %v353 = vrcp.pop %v349
    %v354 = vmul.f32 %v344, %v353
    %v355 = vrcp.pop %v352
    %v356 = vmul.f32 %v346, %v355
    %357 = vrot.lane.b32.xlu0 %v171, 64
    %v358 = vpop.permute.xlu0 %357
    %v361 = vsel %vm334, %v354, 0
    %363 = vmatprep.subr.mxu0 0.0
    %364 = vmatpush1.msra.mxu0 0.0
    %365 = vmatprep.subr.mxu0 0.0
    %366 = vmatpush1.msra.mxu0 0.0
    %367 = vmatprep.subr.mxu0 0.0
    %368 = vmatpush1.msra.mxu0 0.0
    %369 = vmatprep.subr.mxu0 0.0
    %370 = vmatpush1.msra.mxu0 0.0
    %371 = vmatprep.subr.mxu0 0.0
    %372 = vmatpush1.msra.mxu0 0.0
    %373 = vmatprep.subr.mxu0 0.0
    %374 = vmatpush1.msra.mxu0 0.0
    %375 = vmatprep.subr.mxu0 0.0
    %376 = vmatpush1.msra.mxu0 0.0
    %377 = vmatprep.subr.mxu0 0.0
    %378 = vmatpush1.msra.mxu0 0.0
    %379 = vmatprep.subr.mxu0 0.0
    %380 = vmatpush1.msra.mxu0 0.0
    %381 = vmatprep.subr.mxu0 0.0
    %382 = vmatpush1.msra.mxu0 0.0
    %383 = vmatprep.subr.mxu0 0.0
    %384 = vmatpush1.msra.mxu0 0.0
    %385 = vmatprep.subr.mxu0 0.0
    %386 = vmatpush1.msra.mxu0 0.0
    %387 = vmatprep.subr.mxu0 0.0
    %388 = vmatpush1.msra.mxu0 0.0
    %389 = vmatprep.subr.mxu0 0.0
    %390 = vmatpush1.msra.mxu0 0.0
    %391 = vmatprep.subr.mxu0 0.0
    %392 = vmatpush1.msra.mxu0 0.0
    %393 = vmatprep.subr.mxu0 0.0
    %394 = vmatpush1.msra.mxu0 %v358
    %395 = vmatprep.subr.mxu0 0.0
    %396 = vmatpush2.msra.mxu0 0.0
    %397 = vmatprep.subr.mxu0 0.0
    %398 = vmatpush2.msra.mxu0 0.0
    %399 = vmatprep.subr.mxu0 0.0
    %400 = vmatpush2.msra.mxu0 0.0
    %401 = vmatprep.subr.mxu0 0.0
    %402 = vmatpush2.msra.mxu0 0.0
    %403 = vmatprep.subr.mxu0 0.0
    %404 = vmatpush2.msra.mxu0 0.0
    %405 = vmatprep.subr.mxu0 0.0
    %406 = vmatpush2.msra.mxu0 0.0
    %407 = vmatprep.subr.mxu0 0.0
    %408 = vmatpush2.msra.mxu0 0.0
    %409 = vmatprep.subr.mxu0 0.0
    %410 = vmatpush2.msra.mxu0 0.0
    %411 = vmatprep.subr.mxu0 0.0
    %412 = vmatpush2.msra.mxu0 0.0
    %413 = vmatprep.subr.mxu0 0.0
    %414 = vmatpush2.msra.mxu0 0.0
    %415 = vmatprep.subr.mxu0 0.0
    %416 = vmatpush2.msra.mxu0 0.0
    %417 = vmatprep.subr.mxu0 0.0
    %418 = vmatpush2.msra.mxu0 0.0
    %419 = vmatprep.subr.mxu0 0.0
    %420 = vmatpush2.msra.mxu0 0.0
    %421 = vmatprep.subr.mxu0 0.0
    %422 = vmatpush2.msra.mxu0 0.0
    %423 = vmatprep.subr.mxu0 0.0
    %424 = vmatpush2.msra.mxu0 0.0
    %425 = vmatprep.subr.mxu0 0.0
    %426 = vmatpush2.msra.mxu0 0.0
    %427 = vmatprep.mubr.f32.mxu0 0.0
    %428 = vmatmul.mubr.f32.gmra.mxu0 %v361
    %v429 = vpop.f32.mrf.mxu0
    %v430 = vadd.f32 0.0, %v429
    %v431 = vpop.f32.mrf.mxu0
    %432 = vdwg.mxu0
    %433 = vrot.lane.b32.xlu0 %v176, 64
    %v434 = vpop.permute.xlu0 %433
    %v437 = vsel %vm334, %v356, 0
    %439 = vmatprep.subr.mxu0 0.0
    %440 = vmatpush1.msra.mxu0 0.0
    %441 = vmatprep.subr.mxu0 0.0
    %442 = vmatpush1.msra.mxu0 0.0
    %443 = vmatprep.subr.mxu0 0.0
    %444 = vmatpush1.msra.mxu0 0.0
    %445 = vmatprep.subr.mxu0 0.0
    %446 = vmatpush1.msra.mxu0 0.0
    %447 = vmatprep.subr.mxu0 0.0
    %448 = vmatpush1.msra.mxu0 0.0
    %449 = vmatprep.subr.mxu0 0.0
    %450 = vmatpush1.msra.mxu0 0.0
    %451 = vmatprep.subr.mxu0 0.0
    %452 = vmatpush1.msra.mxu0 0.0
    %453 = vmatprep.subr.mxu0 0.0
    %454 = vmatpush1.msra.mxu0 0.0
    %455 = vmatprep.subr.mxu0 0.0
    %456 = vmatpush1.msra.mxu0 0.0
    %457 = vmatprep.subr.mxu0 0.0
    %458 = vmatpush1.msra.mxu0 0.0
    %459 = vmatprep.subr.mxu0 0.0
    %460 = vmatpush1.msra.mxu0 0.0
    %461 = vmatprep.subr.mxu0 0.0
    %462 = vmatpush1.msra.mxu0 0.0
    %463 = vmatprep.subr.mxu0 0.0
    %464 = vmatpush1.msra.mxu0 0.0
    %465 = vmatprep.subr.mxu0 0.0
    %466 = vmatpush1.msra.mxu0 0.0
    %467 = vmatprep.subr.mxu0 0.0
    %468 = vmatpush1.msra.mxu0 0.0
    %469 = vmatprep.subr.mxu0 0.0
    %470 = vmatpush1.msra.mxu0 %v434
    %471 = vmatprep.subr.mxu0 0.0
    %472 = vmatpush2.msra.mxu0 0.0
    %473 = vmatprep.subr.mxu0 0.0
    %474 = vmatpush2.msra.mxu0 0.0
    %475 = vmatprep.subr.mxu0 0.0
    %476 = vmatpush2.msra.mxu0 0.0
    %477 = vmatprep.subr.mxu0 0.0
    %478 = vmatpush2.msra.mxu0 0.0
    %479 = vmatprep.subr.mxu0 0.0
    %480 = vmatpush2.msra.mxu0 0.0
    %481 = vmatprep.subr.mxu0 0.0
    %482 = vmatpush2.msra.mxu0 0.0
    %483 = vmatprep.subr.mxu0 0.0
    %484 = vmatpush2.msra.mxu0 0.0
    %485 = vmatprep.subr.mxu0 0.0
    %486 = vmatpush2.msra.mxu0 0.0
    %487 = vmatprep.subr.mxu0 0.0
    %488 = vmatpush2.msra.mxu0 0.0
    %489 = vmatprep.subr.mxu0 0.0
    %490 = vmatpush2.msra.mxu0 0.0
    %491 = vmatprep.subr.mxu0 0.0
    %492 = vmatpush2.msra.mxu0 0.0
    %493 = vmatprep.subr.mxu0 0.0
    %494 = vmatpush2.msra.mxu0 0.0
    %495 = vmatprep.subr.mxu0 0.0
    %496 = vmatpush2.msra.mxu0 0.0
    %497 = vmatprep.subr.mxu0 0.0
    %498 = vmatpush2.msra.mxu0 0.0
    %499 = vmatprep.subr.mxu0 0.0
    %500 = vmatpush2.msra.mxu0 0.0
    %501 = vmatprep.subr.mxu0 0.0
    %502 = vmatpush2.msra.mxu0 0.0
    %503 = vmatprep.mubr.f32.mxu0 0.0
    %504 = vmatmul.mubr.f32.gmra.mxu0 %v437
    %v505 = vpop.f32.mrf.mxu0
    %v506 = vadd.f32 0.0, %v505
    %v507 = vpop.f32.mrf.mxu0
    %508 = vdwg.mxu0
    %509 = vrot.lane.b32.xlu0 %v171, 112
    %v510 = vpop.permute.xlu0 %509
    %511 = vrot.lane.b32.xlu0 %v171, 80
    %v512 = vpop.permute.xlu0 %511
    %v513 = vsel %vm182, %v510, 0
    %v515 = vsel %vm182, %v512, 0
    %517 = vmatprep.subr.mxu0 0.0
    %518 = vmatpush1.xpose.msra.mxu0 0.0
    %519 = vmatprep.subr.mxu0 0.0
    %520 = vmatpush1.xpose.msra.mxu0 0.0
    %521 = vmatprep.subr.mxu0 0.0
    %522 = vmatpush1.xpose.msra.mxu0 0.0
    %523 = vmatprep.subr.mxu0 0.0
    %524 = vmatpush1.xpose.msra.mxu0 0.0
    %525 = vmatprep.subr.mxu0 0.0
    %526 = vmatpush1.xpose.msra.mxu0 0.0
    %527 = vmatprep.subr.mxu0 0.0
    %528 = vmatpush1.xpose.msra.mxu0 0.0
    %529 = vmatprep.subr.mxu0 0.0
    %530 = vmatpush1.xpose.msra.mxu0 0.0
    %531 = vmatprep.subr.mxu0 0.0
    %532 = vmatpush1.xpose.msra.mxu0 0.0
    %533 = vmatprep.subr.mxu0 0.0
    %534 = vmatpush1.xpose.msra.mxu0 0.0
    %535 = vmatprep.subr.mxu0 0.0
    %536 = vmatpush1.xpose.msra.mxu0 0.0
    %537 = vmatprep.subr.mxu0 0.0
    %538 = vmatpush1.xpose.msra.mxu0 0.0
    %539 = vmatprep.subr.mxu0 0.0
    %540 = vmatpush1.xpose.msra.mxu0 0.0
    %541 = vmatprep.subr.mxu0 0.0
    %542 = vmatpush1.xpose.msra.mxu0 0.0
    %543 = vmatprep.subr.mxu0 0.0
    %544 = vmatpush1.xpose.msra.mxu0 0.0
    %545 = vmatprep.subr.mxu0 0.0
    %546 = vmatpush1.xpose.msra.mxu0 0.0
    %547 = vmatprep.subr.mxu0 0.0
    %548 = vmatpush1.xpose.msra.mxu0 %v515
    %549 = vmatprep.subr.mxu0 0.0
    %550 = vmatpush2.xpose.msra.mxu0 0.0
    %551 = vmatprep.subr.mxu0 0.0
    %552 = vmatpush2.xpose.msra.mxu0 0.0
    %553 = vmatprep.subr.mxu0 0.0
    %554 = vmatpush2.xpose.msra.mxu0 0.0
    %555 = vmatprep.subr.mxu0 0.0
    %556 = vmatpush2.xpose.msra.mxu0 0.0
    %557 = vmatprep.subr.mxu0 0.0
    %558 = vmatpush2.xpose.msra.mxu0 0.0
    %559 = vmatprep.subr.mxu0 0.0
    %560 = vmatpush2.xpose.msra.mxu0 0.0
    %561 = vmatprep.subr.mxu0 0.0
    %562 = vmatpush2.xpose.msra.mxu0 0.0
    %563 = vmatprep.subr.mxu0 0.0
    %564 = vmatpush2.xpose.msra.mxu0 0.0
    %565 = vmatprep.subr.mxu0 0.0
    %566 = vmatpush2.xpose.msra.mxu0 0.0
    %567 = vmatprep.subr.mxu0 0.0
    %568 = vmatpush2.xpose.msra.mxu0 0.0
    %569 = vmatprep.subr.mxu0 0.0
    %570 = vmatpush2.xpose.msra.mxu0 0.0
    %571 = vmatprep.subr.mxu0 0.0
    %572 = vmatpush2.xpose.msra.mxu0 0.0
    %573 = vmatprep.subr.mxu0 0.0
    %574 = vmatpush2.xpose.msra.mxu0 0.0
    %575 = vmatprep.subr.mxu0 0.0
    %576 = vmatpush2.xpose.msra.mxu0 0.0
    %577 = vmatprep.subr.mxu0 0.0
    %578 = vmatpush2.xpose.msra.mxu0 0.0
    %579 = vmatprep.subr.mxu0 0.0
    %580 = vmatpush2.xpose.msra.mxu0 0.0
    %581 = vmatprep.mubr.f32.mxu0 0.0
    %582 = vmatmul.mubr.f32.gmra.mxu0 %v513
    %v583 = vpop.f32.mrf.mxu0
    %v584 = vadd.f32 0.0, %v583
    %v585 = vpop.f32.mrf.mxu0
    %586 = vdwg.mxu0
    %587 = vrot.lane.b32.xlu0 %v176, 112
    %v588 = vpop.permute.xlu0 %587
    %589 = vrot.lane.b32.xlu0 %v176, 80
    %v590 = vpop.permute.xlu0 %589
    %v591 = vsel %vm182, %v588, 0
    %v593 = vsel %vm182, %v590, 0
    %595 = vmatprep.subr.mxu0 0.0
    %596 = vmatpush1.xpose.msra.mxu0 0.0
    %597 = vmatprep.subr.mxu0 0.0
    %598 = vmatpush1.xpose.msra.mxu0 0.0
    %599 = vmatprep.subr.mxu0 0.0
    %600 = vmatpush1.xpose.msra.mxu0 0.0
    %601 = vmatprep.subr.mxu0 0.0
    %602 = vmatpush1.xpose.msra.mxu0 0.0
    %603 = vmatprep.subr.mxu0 0.0
    %604 = vmatpush1.xpose.msra.mxu0 0.0
    %605 = vmatprep.subr.mxu0 0.0
    %606 = vmatpush1.xpose.msra.mxu0 0.0
    %607 = vmatprep.subr.mxu0 0.0
    %608 = vmatpush1.xpose.msra.mxu0 0.0
    %609 = vmatprep.subr.mxu0 0.0
    %610 = vmatpush1.xpose.msra.mxu0 0.0
    %611 = vmatprep.subr.mxu0 0.0
    %612 = vmatpush1.xpose.msra.mxu0 0.0
    %613 = vmatprep.subr.mxu0 0.0
    %614 = vmatpush1.xpose.msra.mxu0 0.0
    %615 = vmatprep.subr.mxu0 0.0
    %616 = vmatpush1.xpose.msra.mxu0 0.0
    %617 = vmatprep.subr.mxu0 0.0
    %618 = vmatpush1.xpose.msra.mxu0 0.0
    %619 = vmatprep.subr.mxu0 0.0
    %620 = vmatpush1.xpose.msra.mxu0 0.0
    %621 = vmatprep.subr.mxu0 0.0
    %622 = vmatpush1.xpose.msra.mxu0 0.0
    %623 = vmatprep.subr.mxu0 0.0
    %624 = vmatpush1.xpose.msra.mxu0 0.0
    %625 = vmatprep.subr.mxu0 0.0
    %626 = vmatpush1.xpose.msra.mxu0 %v593
    %627 = vmatprep.subr.mxu0 0.0
    %628 = vmatpush2.xpose.msra.mxu0 0.0
    %629 = vmatprep.subr.mxu0 0.0
    %630 = vmatpush2.xpose.msra.mxu0 0.0
    %631 = vmatprep.subr.mxu0 0.0
    %632 = vmatpush2.xpose.msra.mxu0 0.0
    %633 = vmatprep.subr.mxu0 0.0
    %634 = vmatpush2.xpose.msra.mxu0 0.0
    %635 = vmatprep.subr.mxu0 0.0
    %636 = vmatpush2.xpose.msra.mxu0 0.0
    %637 = vmatprep.subr.mxu0 0.0
    %638 = vmatpush2.xpose.msra.mxu0 0.0
    %639 = vmatprep.subr.mxu0 0.0
    %640 = vmatpush2.xpose.msra.mxu0 0.0
    %641 = vmatprep.subr.mxu0 0.0
    %642 = vmatpush2.xpose.msra.mxu0 0.0
    %643 = vmatprep.subr.mxu0 0.0
    %644 = vmatpush2.xpose.msra.mxu0 0.0
    %645 = vmatprep.subr.mxu0 0.0
    %646 = vmatpush2.xpose.msra.mxu0 0.0
    %647 = vmatprep.subr.mxu0 0.0
    %648 = vmatpush2.xpose.msra.mxu0 0.0
    %649 = vmatprep.subr.mxu0 0.0
    %650 = vmatpush2.xpose.msra.mxu0 0.0
    %651 = vmatprep.subr.mxu0 0.0
    %652 = vmatpush2.xpose.msra.mxu0 0.0
    %653 = vmatprep.subr.mxu0 0.0
    %654 = vmatpush2.xpose.msra.mxu0 0.0
    %655 = vmatprep.subr.mxu0 0.0
    %656 = vmatpush2.xpose.msra.mxu0 0.0
    %657 = vmatprep.subr.mxu0 0.0
    %658 = vmatpush2.xpose.msra.mxu0 0.0
    %659 = vmatprep.mubr.f32.mxu0 0.0
    %660 = vmatmul.mubr.f32.gmra.mxu0 %v591
    %v661 = vpop.f32.mrf.mxu0
    %v662 = vadd.f32 0.0, %v661
    %v663 = vpop.f32.mrf.mxu0
    %664 = vdwg.mxu0
    %v665 = vsel %vm334, %v584, -inf
    %666 = vmax.xlane.f32.xlu0 %v665
    %v667 = vpop.xlane.xlu0 %666
    %v668 = vsel %vm334, %v662, -inf
    %669 = vmax.xlane.f32.xlu0 %v668
    %v670 = vpop.xlane.xlu0 %669
    %v671 = vsub.f32 %v584, %v667
    %v672 = vsub.f32 %v662, %v670
    %v673 = vmul.f32 %v671, 1.442695
    %v674 = vpow.pop %v673
    %v675 = vmul.f32 %v672, 1.442695
    %v676 = vpow.pop %v675
    %v677 = vsel %vm334, %v674, 0.0
    %678 = vadd.xlane.f32.xlu0 %v677
    %v679 = vpop.xlane.xlu0 %678
    %v680 = vsel %vm334, %v676, 0.0
    %681 = vadd.xlane.f32.xlu0 %v680
    %v682 = vpop.xlane.xlu0 %681
    %v683 = vrcp.pop %v679
    %v684 = vmul.f32 %v674, %v683
    %v685 = vrcp.pop %v682
    %v686 = vmul.f32 %v676, %v685
    %687 = vrot.lane.b32.xlu0 %v171, 48
    %v688 = vpop.permute.xlu0 %687
    %v691 = vsel %vm334, %v684, 0
    %693 = vmatprep.subr.mxu0 0.0
    %694 = vmatpush1.msra.mxu0 0.0
    %695 = vmatprep.subr.mxu0 0.0
    %696 = vmatpush1.msra.mxu0 0.0
    %697 = vmatprep.subr.mxu0 0.0
    %698 = vmatpush1.msra.mxu0 0.0
    %699 = vmatprep.subr.mxu0 0.0
    %700 = vmatpush1.msra.mxu0 0.0
    %701 = vmatprep.subr.mxu0 0.0
    %702 = vmatpush1.msra.mxu0 0.0
    %703 = vmatprep.subr.mxu0 0.0
    %704 = vmatpush1.msra.mxu0 0.0
    %705 = vmatprep.subr.mxu0 0.0
    %706 = vmatpush1.msra.mxu0 0.0
    %707 = vmatprep.subr.mxu0 0.0
    %708 = vmatpush1.msra.mxu0 0.0
    %709 = vmatprep.subr.mxu0 0.0
    %710 = vmatpush1.msra.mxu0 0.0
    %711 = vmatprep.subr.mxu0 0.0
    %712 = vmatpush1.msra.mxu0 0.0
    %713 = vmatprep.subr.mxu0 0.0
    %714 = vmatpush1.msra.mxu0 0.0
    %715 = vmatprep.subr.mxu0 0.0
    %716 = vmatpush1.msra.mxu0 0.0
    %717 = vmatprep.subr.mxu0 0.0
    %718 = vmatpush1.msra.mxu0 0.0
    %719 = vmatprep.subr.mxu0 0.0
    %720 = vmatpush1.msra.mxu0 0.0
    %721 = vmatprep.subr.mxu0 0.0
    %722 = vmatpush1.msra.mxu0 0.0
    %723 = vmatprep.subr.mxu0 0.0
    %724 = vmatpush1.msra.mxu0 %v688
    %725 = vmatprep.subr.mxu0 0.0
    %726 = vmatpush2.msra.mxu0 0.0
    %727 = vmatprep.subr.mxu0 0.0
    %728 = vmatpush2.msra.mxu0 0.0
    %729 = vmatprep.subr.mxu0 0.0
    %730 = vmatpush2.msra.mxu0 0.0
    %731 = vmatprep.subr.mxu0 0.0
    %732 = vmatpush2.msra.mxu0 0.0
    %733 = vmatprep.subr.mxu0 0.0
    %734 = vmatpush2.msra.mxu0 0.0
    %735 = vmatprep.subr.mxu0 0.0
    %736 = vmatpush2.msra.mxu0 0.0
    %737 = vmatprep.subr.mxu0 0.0
    %738 = vmatpush2.msra.mxu0 0.0
    %739 = vmatprep.subr.mxu0 0.0
    %740 = vmatpush2.msra.mxu0 0.0
    %741 = vmatprep.subr.mxu0 0.0
    %742 = vmatpush2.msra.mxu0 0.0
    %743 = vmatprep.subr.mxu0 0.0
    %744 = vmatpush2.msra.mxu0 0.0
    %745 = vmatprep.subr.mxu0 0.0
    %746 = vmatpush2.msra.mxu0 0.0
    %747 = vmatprep.subr.mxu0 0.0
    %748 = vmatpush2.msra.mxu0 0.0
    %749 = vmatprep.subr.mxu0 0.0
    %750 = vmatpush2.msra.mxu0 0.0
    %751 = vmatprep.subr.mxu0 0.0
    %752 = vmatpush2.msra.mxu0 0.0
    %753 = vmatprep.subr.mxu0 0.0
    %754 = vmatpush2.msra.mxu0 0.0
    %755 = vmatprep.subr.mxu0 0.0
    %756 = vmatpush2.msra.mxu0 0.0
    %757 = vmatprep.mubr.f32.mxu0 0.0
    %758 = vmatmul.mubr.f32.gmra.mxu0 %v691
    %v759 = vpop.f32.mrf.mxu0
    %v760 = vadd.f32 0.0, %v759
    %v761 = vpop.f32.mrf.mxu0
    %762 = vdwg.mxu0
    %763 = vrot.lane.b32.xlu0 %v176, 48
    %v764 = vpop.permute.xlu0 %763
    %v767 = vsel %vm334, %v686, 0
    %769 = vmatprep.subr.mxu0 0.0
    %770 = vmatpush1.msra.mxu0 0.0
    %771 = vmatprep.subr.mxu0 0.0
    %772 = vmatpush1.msra.mxu0 0.0
    %773 = vmatprep.subr.mxu0 0.0
    %774 = vmatpush1.msra.mxu0 0.0
    %775 = vmatprep.subr.mxu0 0.0
    %776 = vmatpush1.msra.mxu0 0.0
    %777 = vmatprep.subr.mxu0 0.0
    %778 = vmatpush1.msra.mxu0 0.0
    %779 = vmatprep.subr.mxu0 0.0
    %780 = vmatpush1.msra.mxu0 0.0
    %781 = vmatprep.subr.mxu0 0.0
    %782 = vmatpush1.msra.mxu0 0.0
    %783 = vmatprep.subr.mxu0 0.0
    %784 = vmatpush1.msra.mxu0 0.0
    %785 = vmatprep.subr.mxu0 0.0
    %786 = vmatpush1.msra.mxu0 0.0
    %787 = vmatprep.subr.mxu0 0.0
    %788 = vmatpush1.msra.mxu0 0.0
    %789 = vmatprep.subr.mxu0 0.0
    %790 = vmatpush1.msra.mxu0 0.0
    %791 = vmatprep.subr.mxu0 0.0
    %792 = vmatpush1.msra.mxu0 0.0
    %793 = vmatprep.subr.mxu0 0.0
    %794 = vmatpush1.msra.mxu0 0.0
    %795 = vmatprep.subr.mxu0 0.0
    %796 = vmatpush1.msra.mxu0 0.0
    %797 = vmatprep.subr.mxu0 0.0
    %798 = vmatpush1.msra.mxu0 0.0
    %799 = vmatprep.subr.mxu0 0.0
    %800 = vmatpush1.msra.mxu0 %v764
    %801 = vmatprep.subr.mxu0 0.0
    %802 = vmatpush2.msra.mxu0 0.0
    %803 = vmatprep.subr.mxu0 0.0
    %804 = vmatpush2.msra.mxu0 0.0
    %805 = vmatprep.subr.mxu0 0.0
    %806 = vmatpush2.msra.mxu0 0.0
    %807 = vmatprep.subr.mxu0 0.0
    %808 = vmatpush2.msra.mxu0 0.0
    %809 = vmatprep.subr.mxu0 0.0
    %810 = vmatpush2.msra.mxu0 0.0
    %811 = vmatprep.subr.mxu0 0.0
    %812 = vmatpush2.msra.mxu0 0.0
    %813 = vmatprep.subr.mxu0 0.0
    %814 = vmatpush2.msra.mxu0 0.0
    %815 = vmatprep.subr.mxu0 0.0
    %816 = vmatpush2.msra.mxu0 0.0
    %817 = vmatprep.subr.mxu0 0.0
    %818 = vmatpush2.msra.mxu0 0.0
    %819 = vmatprep.subr.mxu0 0.0
    %820 = vmatpush2.msra.mxu0 0.0
    %821 = vmatprep.subr.mxu0 0.0
    %822 = vmatpush2.msra.mxu0 0.0
    %823 = vmatprep.subr.mxu0 0.0
    %824 = vmatpush2.msra.mxu0 0.0
    %825 = vmatprep.subr.mxu0 0.0
    %826 = vmatpush2.msra.mxu0 0.0
    %827 = vmatprep.subr.mxu0 0.0
    %828 = vmatpush2.msra.mxu0 0.0
    %829 = vmatprep.subr.mxu0 0.0
    %830 = vmatpush2.msra.mxu0 0.0
    %831 = vmatprep.subr.mxu0 0.0
    %832 = vmatpush2.msra.mxu0 0.0
    %833 = vmatprep.mubr.f32.mxu0 0.0
    %834 = vmatmul.mubr.f32.gmra.mxu0 %v767
    %v835 = vpop.f32.mrf.mxu0
    %v836 = vadd.f32 0.0, %v835
    %v837 = vpop.f32.mrf.mxu0
    %838 = vdwg.mxu0
    %841 = vrot.lane.b32.xlu0 %v760, 16
    %v842 = vpop.permute.xlu0 %841
    %843 = vrot.lane.b32.xlu0 %v836, 16
    %v844 = vpop.permute.xlu0 %843
    %v847 = vsel %vm182, %v430, %v842
    %v848 = vsel %vm182, %v506, %v844
    %v849 = vadd.f32 %v39, %v847
    %v850 = vadd.f32 %v40, %v848
    %v851 = vld [vmem:[%s5] sm:$0x1]
    %v852 = vld [vmem:[%s6] sm:$0x1]
    %v853 = vsel %vm43, %v849, 0.0
    %854 = vadd.xlane.f32.xlu0 %v853
    %v855 = vpop.xlane.xlu0 %854
    %v856 = vsel %vm43, %v850, 0.0
    %857 = vadd.xlane.f32.xlu0 %v856
    %v858 = vpop.xlane.xlu0 %857
    %v859 = vmul.f32 %v855, %v50
    %v860 = vmul.f32 %v858, %v50
    %v861 = vsub.f32 %v849, %v859
    %v862 = vsub.f32 %v850, %v860
    %v863 = vmul.f32 %v861, %v861
    %v864 = vmul.f32 %v862, %v862
    %v865 = vsel %vm43, %v863, 0.0
    %866 = vadd.xlane.f32.xlu0 %v865
    %v867 = vpop.xlane.xlu0 %866
    %v868 = vsel %vm43, %v864, 0.0
    %869 = vadd.xlane.f32.xlu0 %v868
    %v870 = vpop.xlane.xlu0 %869
    %v871 = vmul.f32 %v867, %v50
    %v872 = vmul.f32 %v870, %v50
    %v873 = vadd.f32 %v871, 1e-05
    %v874 = vadd.f32 %v872, 1e-05
    %v875 = vrsqrt.pop %v873
    %v876 = vrsqrt.pop %v874
    %v877 = vmul.f32 %v861, %v875
    %v878 = vmul.f32 %v862, %v876
    %v880 = vlaneseq
    %v881 = vshrl.u32 %v880, 7
    %v882 = vsub.s32 0, %v881
    %v883 = vrot.slane %v851, %v882
    %v885 = vmul.f32 %v877, %v883
    %v886 = vmul.f32 %v878, %v883
    %v888 = vlaneseq
    %v889 = vshrl.u32 %v888, 7
    %v890 = vsub.s32 0, %v889
    %v891 = vrot.slane %v852, %v890
    %v893 = vadd.f32 %v885, %v891
    %v894 = vadd.f32 %v886, %v891
    %v895 = vld [vmem:[%s7] sm:$0xff]
    %v896 = vld [vmem:[%s7 + $0x8] sm:$0xff]
    %v897 = vld [vmem:[%s7 + $0x10] sm:$0xff]
    %v898 = vld [vmem:[%s7 + $0x18] sm:$0xff]
    %v899 = vld [vmem:[%s8] sm:$0x1]
    %v901 = vlaneseq
    %v902 = vshrl.u32 %v901, 7
    %v903 = vsub.s32 0, %v902
    %v904 = vrot.slane %v899, %v903
    %v907 = vsel %vm43, %v893, 0
    %v910 = vsel %vm43, %v894, 0
    %912 = vmatprep.subr.mxu0 0.0
    %913 = vmatpush1.msra.mxu0 0.0
    %914 = vmatprep.subr.mxu0 0.0
    %915 = vmatpush1.msra.mxu0 0.0
    %916 = vmatprep.subr.mxu0 0.0
    %917 = vmatpush1.msra.mxu0 0.0
    %918 = vmatprep.subr.mxu0 0.0
    %919 = vmatpush1.msra.mxu0 0.0
    %920 = vmatprep.subr.mxu0 0.0
    %921 = vmatpush1.msra.mxu0 0.0
    %922 = vmatprep.subr.mxu0 0.0
    %923 = vmatpush1.msra.mxu0 0.0
    %924 = vmatprep.subr.mxu0 0.0
    %925 = vmatpush1.msra.mxu0 0.0
    %926 = vmatprep.subr.mxu0 0.0
    %927 = vmatpush1.msra.mxu0 0.0
    %928 = vmatprep.subr.mxu0 0.0
    %929 = vmatpush1.msra.mxu0 0.0
    %930 = vmatprep.subr.mxu0 0.0
    %931 = vmatpush1.msra.mxu0 0.0
    %932 = vmatprep.subr.mxu0 0.0
    %933 = vmatpush1.msra.mxu0 0.0
    %934 = vmatprep.subr.mxu0 0.0
    %935 = vmatpush1.msra.mxu0 0.0
    %936 = vmatprep.subr.mxu0 0.0
    %937 = vmatpush1.msra.mxu0 %v898
    %938 = vmatprep.subr.mxu0 0.0
    %939 = vmatpush1.msra.mxu0 %v897
    %940 = vmatprep.subr.mxu0 0.0
    %941 = vmatpush1.msra.mxu0 %v896
    %942 = vmatprep.subr.mxu0 0.0
    %943 = vmatpush1.msra.mxu0 %v895
    %944 = vmatprep.subr.mxu0 0.0
    %945 = vmatpush2.msra.mxu0 0.0
    %946 = vmatprep.subr.mxu0 0.0
    %947 = vmatpush2.msra.mxu0 0.0
    %948 = vmatprep.subr.mxu0 0.0
    %949 = vmatpush2.msra.mxu0 0.0
    %950 = vmatprep.subr.mxu0 0.0
    %951 = vmatpush2.msra.mxu0 0.0
    %952 = vmatprep.subr.mxu0 0.0
    %953 = vmatpush2.msra.mxu0 0.0
    %954 = vmatprep.subr.mxu0 0.0
    %955 = vmatpush2.msra.mxu0 0.0
    %956 = vmatprep.subr.mxu0 0.0
    %957 = vmatpush2.msra.mxu0 0.0
    %958 = vmatprep.subr.mxu0 0.0
    %959 = vmatpush2.msra.mxu0 0.0
    %960 = vmatprep.subr.mxu0 0.0
    %961 = vmatpush2.msra.mxu0 0.0
    %962 = vmatprep.subr.mxu0 0.0
    %963 = vmatpush2.msra.mxu0 0.0
    %964 = vmatprep.subr.mxu0 0.0
    %965 = vmatpush2.msra.mxu0 0.0
    %966 = vmatprep.subr.mxu0 0.0
    %967 = vmatpush2.msra.mxu0 0.0
    %968 = vmatprep.subr.mxu0 0.0
    %969 = vmatpush2.msra.mxu0 0.0
    %970 = vmatprep.subr.mxu0 0.0
    %971 = vmatpush2.msra.mxu0 0.0
    %972 = vmatprep.subr.mxu0 0.0
    %973 = vmatpush2.msra.mxu0 0.0
    %974 = vmatprep.subr.mxu0 0.0
    %975 = vmatpush2.msra.mxu0 0.0
    %976 = vmatprep.mubr.f32.mxu0 0.0
    %977 = vmatmul.mubr.f32.gmra.mxu0 %v907
    %v978 = vpop.f32.mrf.mxu0
    %v979 = vadd.f32 %v904, %v978
    %v980 = vpop.f32.mrf.mxu0
    %981 = vmatprep.mubr.f32.mxu0 0.0
    %982 = vmatmul.mubr.f32.gmra.mxu0 %v910
    %v983 = vpop.f32.mrf.mxu0
    %v984 = vadd.f32 %v904, %v983
    %v985 = vpop.f32.mrf.mxu0
    %986 = vdwg.mxu0
    %v987 = vmul.f32 %v979, 0.5
    %v988 = vmul.f32 %v984, 0.5
    %v989 = vmul.f32 %v979, 0.70710677
    %v990 = vmul.f32 %v984, 0.70710677
    %v991 = vand.u32 2147483647, %v989
    %v992 = vand.u32 2147483647, %v990
    %v993 = vmul.f32 %v991, 0.3275911
    %v994 = vmul.f32 %v992, 0.3275911
    %v995 = vadd.f32 %v993, 1.0
    %v996 = vadd.f32 %v994, 1.0
    %v997 = vrcp.pop %v995
    %v998 = vmul.f32 1.0, %v997
    %v999 = vrcp.pop %v996
    %v1000 = vmul.f32 1.0, %v999
    %v1001 = vmul.f32 %v998, 1.0614054
    %v1002 = vmul.f32 %v1000, 1.0614054
    %v1003 = vadd.f32 %v1001, -1.4531521
    %v1004 = vadd.f32 %v1002, -1.4531521
    %v1005 = vmul.f32 %v1003, %v998
    %v1006 = vmul.f32 %v1004, %v1000
    %v1007 = vadd.f32 %v1005, 1.4214138
    %v1008 = vadd.f32 %v1006, 1.4214138
    %v1009 = vmul.f32 %v1007, %v998
    %v1010 = vmul.f32 %v1008, %v1000
    %v1011 = vadd.f32 %v1009, -0.28449672
    %v1012 = vadd.f32 %v1010, -0.28449672
    %v1013 = vmul.f32 %v1011, %v998
    %v1014 = vmul.f32 %v1012, %v1000
    %v1015 = vadd.f32 %v1013, 0.2548296
    %v1016 = vadd.f32 %v1014, 0.2548296
    %v1017 = vmul.f32 %v1015, %v998
    %v1018 = vmul.f32 %v1016, %v1000
    %v1019 = vsub.f32 0.0, %v991
    %v1020 = vsub.f32 0.0, %v992
    %v1021 = vmul.f32 %v1019, %v991
    %v1022 = vmul.f32 %v1020, %v992
    %v1023 = vmul.f32 %v1021, 1.442695
    %v1024 = vpow.pop %v1023
    %v1025 = vmul.f32 %v1022, 1.442695
    %v1026 = vpow.pop %v1025
    %v1027 = vmul.f32 %v1017, %v1024
    %v1028 = vmul.f32 %v1018, %v1026
    %v1029 = vsub.f32 1.0, %v1027
    %v1030 = vsub.f32 1.0, %v1028
    %vm1031 = vcmp.ge.f32.partialorder %v989, 0.0
    %vm1032 = vcmp.ge.f32.partialorder %v990, 0.0
    %v1033 = vsub.f32 0.0, %v1029
    %v1034 = vsub.f32 0.0, %v1030
    %v1035 = vsel %vm1031, %v1029, %v1033
    %v1036 = vsel %vm1032, %v1030, %v1034
    %v1037 = vadd.f32 %v1035, 1.0
    %v1038 = vadd.f32 %v1036, 1.0
    %v1039 = vmul.f32 %v987, %v1037
    %v1040 = vmul.f32 %v988, %v1038
    %v1041 = vld [vmem:[%s9] sm:$0xff]
    %v1042 = vld [vmem:[%s9 + $0x8] sm:$0xff]
    %v1043 = vld [vmem:[%s9 + $0x10] sm:$0xff]
    %v1044 = vld [vmem:[%s9 + $0x18] sm:$0xff]
    %v1045 = vld [vmem:[%s9 + $0x20] sm:$0xff]
    %v1046 = vld [vmem:[%s9 + $0x28] sm:$0xff]
    %v1047 = vld [vmem:[%s9 + $0x30] sm:$0xff]
    %v1048 = vld [vmem:[%s9 + $0x38] sm:$0xff]
    %v1049 = vld [vmem:[%s9 + $0x40] sm:$0xff]
    %v1050 = vld [vmem:[%s9 + $0x48] sm:$0xff]
    %v1051 = vld [vmem:[%s9 + $0x50] sm:$0xff]
    %v1052 = vld [vmem:[%s9 + $0x58] sm:$0xff]
    %v1053 = vld [vmem:[%s9 + $0x60] sm:$0xff]
    %v1054 = vld [vmem:[%s9 + $0x68] sm:$0xff]
    %v1055 = vld [vmem:[%s9 + $0x70] sm:$0xff]
    %v1056 = vld [vmem:[%s9 + $0x78] sm:$0xff]
    %v1057 = vld [vmem:[%s10] sm:$0x1]
    %v1059 = vlaneseq
    %v1060 = vshrl.u32 %v1059, 7
    %v1061 = vsub.s32 0, %v1060
    %v1062 = vrot.slane %v1057, %v1061
    %1064 = vmatprep.subr.mxu0 0.0
    %1065 = vmatpush1.msra.mxu0 %v1056
    %1066 = vmatprep.subr.mxu0 0.0
    %1067 = vmatpush1.msra.mxu0 %v1055
    %1068 = vmatprep.subr.mxu0 0.0
    %1069 = vmatpush1.msra.mxu0 %v1054
    %1070 = vmatprep.subr.mxu0 0.0
    %1071 = vmatpush1.msra.mxu0 %v1053
    %1072 = vmatprep.subr.mxu0 0.0
    %1073 = vmatpush1.msra.mxu0 %v1052
    %1074 = vmatprep.subr.mxu0 0.0
    %1075 = vmatpush1.msra.mxu0 %v1051
    %1076 = vmatprep.subr.mxu0 0.0
    %1077 = vmatpush1.msra.mxu0 %v1050
    %1078 = vmatprep.subr.mxu0 0.0
    %1079 = vmatpush1.msra.mxu0 %v1049
    %1080 = vmatprep.subr.mxu0 0.0
    %1081 = vmatpush1.msra.mxu0 %v1048
    %1082 = vmatprep.subr.mxu0 0.0
    %1083 = vmatpush1.msra.mxu0 %v1047
    %1084 = vmatprep.subr.mxu0 0.0
    %1085 = vmatpush1.msra.mxu0 %v1046
    %1086 = vmatprep.subr.mxu0 0.0
    %1087 = vmatpush1.msra.mxu0 %v1045
    %1088 = vmatprep.subr.mxu0 0.0
    %1089 = vmatpush1.msra.mxu0 %v1044
    %1090 = vmatprep.subr.mxu0 0.0
    %1091 = vmatpush1.msra.mxu0 %v1043
    %1092 = vmatprep.subr.mxu0 0.0
    %1093 = vmatpush1.msra.mxu0 %v1042
    %1094 = vmatprep.subr.mxu0 0.0
    %1095 = vmatpush1.msra.mxu0 %v1041
    %1096 = vmatprep.subr.mxu0 0.0
    %1097 = vmatpush2.msra.mxu0 0.0
    %1098 = vmatprep.subr.mxu0 0.0
    %1099 = vmatpush2.msra.mxu0 0.0
    %1100 = vmatprep.subr.mxu0 0.0
    %1101 = vmatpush2.msra.mxu0 0.0
    %1102 = vmatprep.subr.mxu0 0.0
    %1103 = vmatpush2.msra.mxu0 0.0
    %1104 = vmatprep.subr.mxu0 0.0
    %1105 = vmatpush2.msra.mxu0 0.0
    %1106 = vmatprep.subr.mxu0 0.0
    %1107 = vmatpush2.msra.mxu0 0.0
    %1108 = vmatprep.subr.mxu0 0.0
    %1109 = vmatpush2.msra.mxu0 0.0
    %1110 = vmatprep.subr.mxu0 0.0
    %1111 = vmatpush2.msra.mxu0 0.0
    %1112 = vmatprep.subr.mxu0 0.0
    %1113 = vmatpush2.msra.mxu0 0.0
    %1114 = vmatprep.subr.mxu0 0.0
    %1115 = vmatpush2.msra.mxu0 0.0
    %1116 = vmatprep.subr.mxu0 0.0
    %1117 = vmatpush2.msra.mxu0 0.0
    %1118 = vmatprep.subr.mxu0 0.0
    %1119 = vmatpush2.msra.mxu0 0.0
    %1120 = vmatprep.subr.mxu0 0.0
    %1121 = vmatpush2.msra.mxu0 0.0
    %1122 = vmatprep.subr.mxu0 0.0
    %1123 = vmatpush2.msra.mxu0 0.0
    %1124 = vmatprep.subr.mxu0 0.0
    %1125 = vmatpush2.msra.mxu0 0.0
    %1126 = vmatprep.subr.mxu0 0.0
    %1127 = vmatpush2.msra.mxu0 0.0
    %1128 = vmatprep.mubr.f32.mxu0 0.0
    %1129 = vmatmul.mubr.f32.gmra.mxu0 %v1039
    %v1130 = vpop.f32.mrf.mxu0
    %v1131 = vadd.f32 %v1062, %v1130
    %v1132 = vpop.f32.mrf.mxu0
    %1133 = vmatprep.mubr.f32.mxu0 0.0
    %1134 = vmatmul.mubr.f32.gmra.mxu0 %v1040
    %v1135 = vpop.f32.mrf.mxu0
    %v1136 = vadd.f32 %v1062, %v1135
    %v1137 = vpop.f32.mrf.mxu0
    %1138 = vdwg.mxu0
    %v1139 = vadd.f32 %v849, %v1131
    %v1140 = vadd.f32 %v850, %v1136
    %1141 = vst.msk [vmem:[#allocation2] sm:$0xff] %vm43, %v1139
    %1142 = vst.msk [vmem:[#allocation2 + $0x8] sm:$0xff] %vm43, %v1140
    // Predicated region
    $region46: #{vit_block.1} parent=1 // pred_check
      _
    $region47: #{vit_block.1} parent=1 // pred_check_branch
      %1144 = sbr.rel (0) target = $region49
    $region48: #{vit_block.1} parent=1 // pred_region
      %s1146 = ssub.s32 256, 256
      %1147 = vsyncadd [#allocation3], %s1146
      %s1148 = sshll.u32 [#allocation2], 4
      %s1149 = int_to_ptr.vmem [resolvable:$true] %s1148
      %1154 = dma.vmem_to_hbm [thread:$0]  %s1149, 256, %s11, [#allocation3], 128, 128, 8
    $region49: #{vit_block.1} parent=1 // pred_fallthru
      _
    // Predicated region
    $region50: #{vit_block.1} parent=1 // pred_check
      _
    $region51: #{vit_block.1} parent=1 // pred_check_branch
      %1156 = sbr.rel (0) target = $region53
    $region52: #{vit_block.1} parent=1 // pred_region
      %1157 = dma.done [#allocation3], 256
    $region53: #{vit_block.1} parent=1 // pred_fallthru
      _
    %1158 = vsyncpa [#allocation3], 1

</llo_original>
